<compile_context>
chip_gen: v5e
topology: v5e:2x2
jax: 0.10.0
libtpu: 0.0.40
codegen_flags: <defaults>
</compile_context>

<pallas_src>
import functools

import jax
import jax.numpy as jnp
from jax.experimental import pallas as pl
from jax.experimental.pallas import tpu as pltpu


def _keyp_head_kernel(w_ref, x_ref, heat_ref, idx_ref, score_ref, *, hw_valid):
    # w_ref:     (K, C)        bf16 1x1-conv weights of the predict head (resident)
    # x_ref:     (Rt, C, HWp)  bf16 pooled features for Rt ROIs (HW lane-padded)
    # heat_ref:  (Rt, K, HWp)  f32 spatially-softmaxed heatmaps
    # idx_ref:   (Rt, K)       i32 spatial argmax (fused decode)
    # score_ref: (Rt, K)       f32 max probability (fused decode)
    rt, _, hwp = x_ref.shape
    kk, cc = w_ref.shape

    x = x_ref[...]                                                # (Rt, C, HWp) bf16
    wb = jnp.broadcast_to(w_ref[...][None], (rt, kk, cc))         # (Rt, K, C) bf16

    # One batched MXU matmul per block (back-to-back pushes, no scalar loop).
    logits = jnp.einsum("rkc,rch->rkh", wb, x,
                        preferred_element_type=jnp.float32)       # (Rt, K, HWp) f32
    # bias cancels under the softmax over HW -> intentionally omitted.

    # Loop-invariant lane index, built once per block; reused for tail mask + argmax.
    lane = jax.lax.broadcasted_iota(jnp.int32, logits.shape, 2)   # (Rt, K, HWp)
    if hw_valid != hwp:   # static: mask padded tail lanes out of softmax/argmax
        logits = jnp.where(lane < hw_valid, logits, -jnp.inf)

    m = jnp.max(logits, axis=-1, keepdims=True)                   # (Rt, K, 1)
    e = jnp.exp(logits - m)                                       # max(e) == 1
    s = jnp.sum(e, axis=-1, keepdims=True)
    inv = 1.0 / s                                                 # exact: rows sum to 1
    heat_ref[...] = (e * inv).astype(heat_ref.dtype)

    # Fused decode: argmax(softmax) == argmax(logits); max prob == 1/s.
    is_max = logits >= m
    idx_ref[...] = jnp.min(jnp.where(is_max, lane, hwp), axis=-1)
    score_ref[...] = inv[..., 0]


def _ceil_to(x, m):
    return -(-x // m) * m


def _chip_plan():
    """Per-generation (VMEM block budget, vmem_limit_bytes, multi-TensorCore)."""
    try:
        vmem = pltpu.get_tpu_info().vmem_capacity_bytes
    except Exception:
        # Unknown chip / interpret mode: conservative values that fit every gen.
        return 24 * 1024 * 1024, None, True
    if vmem <= 64 * 1024 * 1024:
        # v7x: 64 MiB physical VMEM, 2 TensorCores -> keep >=2 parallel blocks.
        return 40 * 1024 * 1024, 56 * 1024 * 1024, True
    # v5e / v6e: 128 MiB physical VMEM, single TensorCore -> biggest block that fits.
    return 64 * 1024 * 1024, 96 * 1024 * 1024, False


def _pick_roi_tile(R, C, K, HWp, budget_bytes, multi_tc):
    """ROIs per block: biggest block fitting the per-generation VMEM budget.

    Counts double-buffered input/output blocks, the resident weights, and the
    f32 in-kernel intermediates of the vectorized block compute.
    """
    in_bytes = C * HWp * 2                        # bf16 features per ROI
    out_bytes = K * HWp * 4 + 2 * K * 4           # f32 heatmap + fused idx/score per ROI
    tmp_bytes = 5 * K * HWp * 4 + K * C * 2       # logits/exp/iota/where/heat temps + w bcast
    per_roi = 2 * (in_bytes + out_bytes) + tmp_bytes
    fixed = 2 * K * C * 2                         # double-buffered weights
    rt = max(1, min(64, (budget_bytes - fixed) // per_roi))

    r_pad = _ceil_to(R, 8)                        # ROIs padded to a sublane multiple
    if multi_tc and r_pad >= 16:
        rt = min(rt, r_pad // 2)                  # >=2 grid blocks (v7x: 2 TensorCores)
    rt = max(8, (min(rt, r_pad) // 8) * 8)
    nb = -(-r_pad // rt)
    rt = _ceil_to(-(-r_pad // nb), 8)             # rebalance blocks to minimize padding
    return rt, nb * rt


@jax.jit
def keyp_head_forward(pooled, w, b=None):
    """pooled: (R, C, Hp, Wp) f32 -> (heatmaps (R,K,Hp,Wp) f32, idx (R,K) i32, score (R,K) f32)."""
    R, C, Hp, Wp = pooled.shape
    K = w.shape[0]
    HW = Hp * Wp
    HWp = _ceil_to(HW, 128)                       # lane-dense flattened spatial dim

    budget, vmem_limit, multi_tc = _chip_plan()
    rt, r_pad = _pick_roi_tile(R, C, K, HWp, budget, multi_tc)
    nb = r_pad // rt

    # Single fused XLA pass over the features (reshape + bf16 cast + pad under jit).
    x = pooled.reshape(R, C, HW).astype(jnp.bfloat16)
    if r_pad != R or HWp != HW:
        x = jnp.pad(x, ((0, r_pad - R), (0, 0), (0, HWp - HW)))
    wq = w.astype(jnp.bfloat16)
    # NOTE: bias `b` is accepted for API parity but unused: a per-(roi,keypoint)
    # constant added before the spatial softmax cancels exactly.
    # TODO(synk): reintroduce the bias if the raw-logits (get_logits) path is exposed.
    del b

    flops = 2 * r_pad * K * C * HWp + 6 * r_pad * K * HWp
    transcendentals = r_pad * K * HWp
    bytes_accessed = (r_pad * C * HWp * 2) + (K * C * 2) \
        + (r_pad * K * HWp * 4) + (2 * r_pad * K * 4)

    kernel = functools.partial(_keyp_head_kernel, hw_valid=HW)

    # TODO(synk): heatmap output could be emitted in bf16 (~-33% HBM writeback) if
    # downstream consumers tolerate it; kept f32 to match the reference semantics.
    heat, idx, score = pl.pallas_call(
        kernel,
        out_shape=(
            jax.ShapeDtypeStruct((r_pad, K, HWp), jnp.float32),
            jax.ShapeDtypeStruct((r_pad, K), jnp.int32),
            jax.ShapeDtypeStruct((r_pad, K), jnp.float32),
        ),
        grid_spec=pltpu.PrefetchScalarGridSpec(
            num_scalar_prefetch=0,
            grid=(nb,),
            in_specs=[
                pl.BlockSpec((K, C), lambda r: (0, 0)),            # weights (resident)
                pl.BlockSpec((rt, C, HWp), lambda r: (r, 0, 0)),   # Rt ROIs per step
            ],
            out_specs=[
                pl.BlockSpec((rt, K, HWp), lambda r: (r, 0, 0)),
                pl.BlockSpec((rt, K), lambda r: (r, 0)),
                pl.BlockSpec((rt, K), lambda r: (r, 0)),
            ],
        ),
        compiler_params=pltpu.CompilerParams(
            dimension_semantics=("parallel",),
            vmem_limit_bytes=vmem_limit),
        cost_estimate=pl.CostEstimate(
            flops=flops,
            transcendentals=transcendentals,
            bytes_accessed=bytes_accessed),
    )(wq, x)

    heat = heat[:R, :, :HW].reshape(R, K, Hp, Wp)
    return heat, idx[:R], score[:R]


def decode_keypoints(rois, idx, score, H, W):
    """Plain-JAX glue mirroring predict_keypoints: argmax index -> image coords.

    rois: (R, >=7) (batch_ix, x1, y1, x2, y2, score, cls)
    idx:  (R, K) flat spatial argmax, score: (R, K) max prob
    returns (R, K, 3) (x, y, score)
    """
    # TODO(synk): `predict_keypoints` is an external op in the original repo;
    # this is the standard Detectron-style decode (argmax + ROI rescale).
    py = (idx // W).astype(jnp.float32) + 0.5
    px = (idx % W).astype(jnp.float32) + 0.5
    x1, y1, x2, y2 = rois[:, 1], rois[:, 2], rois[:, 3], rois[:, 4]
    sx = (x2 - x1) / float(W)
    sy = (y2 - y1) / float(H)
    kx = x1[:, None] + px * sx[:, None]
    ky = y1[:, None] + py * sy[:, None]
    return jnp.stack([kx, ky, score], axis=-1)


def keypnet_get_keyp(rois, pooled, w, b=None):
    """Mirrors KeypNet.get_keyp for the single-level (non-FPN) testing path."""
    if rois.shape[0] == 0:          # forward(): empty dt_bboxes -> {}
        return {}
    # TODO(synk): RoIPool/RoIAlign (`self.roipool`) is an external C++/CUDA
    # extension; `pooled` here stands in for its output.
    heatmaps, idx, score = keyp_head_forward(pooled, w, b)       # fused Pallas kernel
    keypoints = decode_keypoints(rois, idx, score, heatmaps.shape[2], heatmaps.shape[3])
    return {"dt_bboxes": rois, "dt_keyps": keypoints, "KeypNet.blobs.keypoint": heatmaps}


if __name__ == "__main__":
    key = jax.random.PRNGKey(0)
    k_feat, k_w, k_b, k_feat2 = jax.random.split(key, 4)

    R, C, Hp, Wp = 16, 32, 16, 16   # rois, channels, pooled spatial
    K = 8                           # keypoints

    # Deterministic synthetic pooled ROI features (stand-in for roipool output).
    pooled = jax.random.normal(k_feat, (R, C, Hp, Wp), dtype=jnp.float32)

    # Deterministic predict-head parameters (1x1 conv C -> K).
    # TODO(synk): the concrete KeypNet subclass head (conv/deconv stack) is not
    # defined in this file; a 1x1 projection stands in for `self.predict`.
    w = 0.05 * jax.random.normal(k_w, (K, C), dtype=jnp.float32)
    b = 0.01 * jax.random.normal(k_b, (K, 1), dtype=jnp.float32)

    # Deterministic dt_bboxes: (batch_ix, x1, y1, x2, y2, score, cls)
    x1 = jnp.linspace(10.0, 40.0, R)
    y1 = jnp.linspace(5.0, 35.0, R)
    rois = jnp.stack(
        [jnp.zeros(R), x1, y1, x1 + 64.0, y1 + 96.0, jnp.ones(R), jnp.ones(R)],
        axis=-1,
    ).astype(jnp.float32)

    out = keypnet_get_keyp(rois, pooled, w, b)
    heat = jax.block_until_ready(out["KeypNet.blobs.keypoint"])
    keyps = jax.block_until_ready(out["dt_keyps"])

    # Sanity 1: softmax over H*W sums to 1 per (roi, keypoint) (exact reciprocal).
    flat = heat.reshape(R, K, -1)
    sums = flat.sum(-1)
    assert jnp.allclose(sums, 1.0, atol=1e-4), sums

    # Sanity 2a: pure-JAX reference using the same bf16-quantized inputs (tight).
    wq32 = w.astype(jnp.bfloat16).astype(jnp.float32)
    xq32 = pooled.astype(jnp.bfloat16).astype(jnp.float32).reshape(R, C, Hp * Wp)
    logits_q = jnp.einsum("kc,rch->rkh", wq32, xq32) + b[None]   # bias cancels under softmax
    probs_q = jax.nn.softmax(logits_q, axis=-1).reshape(R, K, Hp, Wp)
    assert jnp.max(jnp.abs(heat - probs_q)) < 2e-4

    # Sanity 2b: full-f32 reference (loose: documents the bf16 input cast).
    logits_f = jnp.einsum("kc,rch->rkh", w, pooled.reshape(R, C, Hp * Wp)) + b[None]
    probs_f = jax.nn.softmax(logits_f, axis=-1).reshape(R, K, Hp, Wp)
    assert jnp.max(jnp.abs(heat - probs_f)) < 5e-3

    # Sanity 3: fused argmax/score consistent with the emitted heatmaps.
    _, idx_chk, score_chk = keyp_head_forward(pooled, w, b)
    heat_max = flat.max(-1)
    heat_at_idx = jnp.take_along_axis(flat, idx_chk[..., None], axis=-1)[..., 0]
    assert jnp.allclose(score_chk, heat_max, rtol=1e-4, atol=1e-8)
    assert jnp.allclose(heat_at_idx, heat_max, rtol=1e-4, atol=1e-8)
    assert keyps.shape == (R, K, 3)

    # Sanity 4: non-lane-multiple spatial size + ragged ROI count (padding/masking path).
    R2, Hp2, Wp2 = 5, 12, 12        # HW=144 -> padded to 256 lanes in-kernel
    pooled2 = jax.random.normal(k_feat2, (R2, C, Hp2, Wp2), dtype=jnp.float32)
    heat2, idx2, score2 = keyp_head_forward(pooled2, w, b)
    heat2 = jax.block_until_ready(heat2)
    flat2 = heat2.reshape(R2, K, -1)
    assert heat2.shape == (R2, K, Hp2, Wp2)
    assert jnp.allclose(flat2.sum(-1), 1.0, atol=1e-4)
    assert bool(jnp.all(idx2 < Hp2 * Wp2))                      # tail lanes excluded
    wq32_2 = w.astype(jnp.bfloat16).astype(jnp.float32)
    xq32_2 = pooled2.astype(jnp.bfloat16).astype(jnp.float32).reshape(R2, C, Hp2 * Wp2)
    probs_q2 = jax.nn.softmax(jnp.einsum("kc,rch->rkh", wq32_2, xq32_2), axis=-1)
    assert jnp.max(jnp.abs(flat2 - probs_q2)) < 2e-4
    assert jnp.allclose(score2, flat2.max(-1), rtol=1e-4, atol=1e-8)

    print("KERNEL_OK")
</pallas_src>

<mosaic_0001>
module attributes {stable_mosaic.version = 11 : i64} {
  func.func @_keyp_head_kernel(%arg0: i32, %arg1: memref<8x32xbf16, #tpu.memory_space<vmem>>, %arg2: memref<8x32x256xbf16, #tpu.memory_space<vmem>>, %arg3: memref<8x8x256xf32, #tpu.memory_space<vmem>>, %arg4: memref<8x8xi32, #tpu.memory_space<vmem>>, %arg5: memref<8x8xf32, #tpu.memory_space<vmem>>) attributes {dimension_semantics = [#tpu.dimension_semantics<parallel>], iteration_bounds = array<i64: 2>, scalar_prefetch = 0 : i64, scratch_operands = 0 : i64, tpu.core_type = #tpu.core_type<tc>, window_params = [{pipeline_mode = #tpu.pipeline_mode<synchronous>, transform_indices = @transform_0, window_bounds = array<i64: 8, 32>}, {transform_indices = @transform_1, window_bounds = array<i64: 8, 32, 256>}, {transform_indices = @transform_2, window_bounds = array<i64: 8, 8, 256>}, {transform_indices = @transform_3, window_bounds = array<i64: 8, 8>}, {transform_indices = @transform_4, window_bounds = array<i64: 8, 8>}]} {
    %c0 = arith.constant 0 : index
    %c0_0 = arith.constant 0 : index
    %c0_1 = arith.constant 0 : index
    %0 = vector.load %arg2[%c0, %c0_0, %c0_1] : memref<8x32x256xbf16, #tpu.memory_space<vmem>>, vector<8x32x256xbf16>
    %c0_2 = arith.constant 0 : index
    %c0_3 = arith.constant 0 : index
    %1 = vector.load %arg1[%c0_2, %c0_3] : memref<8x32xbf16, #tpu.memory_space<vmem>>, vector<8x32xbf16>
    %2 = vector.shape_cast %1 : vector<8x32xbf16> to vector<1x8x32xbf16>
    %3 = vector.shape_cast %2 : vector<1x8x32xbf16> to vector<1x8x32xbf16>
    %4 = vector.broadcast %3 : vector<1x8x32xbf16> to vector<8x8x32xbf16>
    "tpu.trace_start"() <{level = 10 : i32, message = "rkc,rch->rkh"}> : () -> ()
    %cst = arith.constant dense<0.000000e+00> : vector<8x8x256xf32>
    %5 = tpu.matmul %4, %0, %cst {dimension_numbers = #tpu.dot_dimension_numbers<[2], [1], [1], [2], [0, 0, 0, 1, 1, 2], [0], [0]>} : vector<8x8x32xbf16>, vector<8x32x256xbf16>, vector<8x8x256xf32> -> vector<8x8x256xf32>
    "tpu.trace_stop"() : () -> ()
    %6 = tpu.iota {dimensions = array<i32: 2>} : vector<8x8x256xi32>
    %cst_4 = arith.constant dense<0xFF800000> : vector<8x8xf32>
    %7 = vector.multi_reduction <maximumf>, %5, %cst_4 [2] : vector<8x8x256xf32> to vector<8x8xf32>
    %8 = vector.shape_cast %7 : vector<8x8xf32> to vector<8x8x1xf32>
    %9 = vector.broadcast %8 : vector<8x8x1xf32> to vector<8x8x256xf32>
    %10 = arith.subf %5, %9 : vector<8x8x256xf32>
    %11 = math.exp %10 : vector<8x8x256xf32>
    %cst_5 = arith.constant dense<0.000000e+00> : vector<8x8xf32>
    %12 = vector.multi_reduction <add>, %11, %cst_5 [2] : vector<8x8x256xf32> to vector<8x8xf32>
    %13 = vector.shape_cast %12 : vector<8x8xf32> to vector<8x8x1xf32>
    %cst_6 = arith.constant 1.000000e+00 : f32
    %14 = vector.broadcast %cst_6 : f32 to vector<8x8x1xf32>
    %15 = arith.divf %14, %13 : vector<8x8x1xf32>
    %16 = vector.broadcast %15 : vector<8x8x1xf32> to vector<8x8x256xf32>
    %17 = arith.mulf %11, %16 : vector<8x8x256xf32>
    %c0_7 = arith.constant 0 : index
    %c0_8 = arith.constant 0 : index
    %c0_9 = arith.constant 0 : index
    %18 = vector.load %arg3[%c0_7, %c0_8, %c0_9] : memref<8x8x256xf32, #tpu.memory_space<vmem>>, vector<8x8x256xf32>
    tpu.vector_store %arg3[%c0_7, %c0_8, %c0_9], %17 {strides = array<i32>} : memref<8x8x256xf32, #tpu.memory_space<vmem>>, vector<8x8x256xf32>,
    %19 = vector.broadcast %8 : vector<8x8x1xf32> to vector<8x8x256xf32>
    %20 = arith.cmpf oge, %5, %19 : vector<8x8x256xf32>
    %c256_i32 = arith.constant 256 : i32
    %21 = vector.broadcast %c256_i32 : i32 to vector<8x8x256xi32>
    %22 = arith.select %20, %6, %21 : vector<8x8x256xi1>, vector<8x8x256xi32>
    %cst_10 = arith.constant dense<2147483647> : vector<8x8xi32>
    %23 = vector.multi_reduction <minsi>, %22, %cst_10 [2] : vector<8x8x256xi32> to vector<8x8xi32>
    %c0_11 = arith.constant 0 : index
    %c0_12 = arith.constant 0 : index
    %24 = vector.load %arg4[%c0_11, %c0_12] : memref<8x8xi32, #tpu.memory_space<vmem>>, vector<8x8xi32>
    tpu.vector_store %arg4[%c0_11, %c0_12], %23 {strides = array<i32>} : memref<8x8xi32, #tpu.memory_space<vmem>>, vector<8x8xi32>,
    %25 = vector.shape_cast %15 : vector<8x8x1xf32> to vector<8x8xf32>
    %c0_13 = arith.constant 0 : index
    %c0_14 = arith.constant 0 : index
    %26 = vector.load %arg5[%c0_13, %c0_14] : memref<8x8xf32, #tpu.memory_space<vmem>>, vector<8x8xf32>
    tpu.vector_store %arg5[%c0_13, %c0_14], %25 {strides = array<i32>} : memref<8x8xf32, #tpu.memory_space<vmem>>, vector<8x8xf32>,
    return
  }
  func.func @transform_0(%arg0: i32) -> (i32, i32) {
    %c0_i32 = arith.constant 0 : i32
    %c0_i32_0 = arith.constant 0 : i32
    %c0_i32_1 = arith.constant 0 : i32
    return %c0_i32, %c0_i32_0 : i32, i32
  }
  func.func @transform_1(%arg0: i32) -> (i32, i32, i32) {
    %c0_i32 = arith.constant 0 : i32
    %c0_i32_0 = arith.constant 0 : i32
    %c0_i32_1 = arith.constant 0 : i32
    return %arg0, %c0_i32, %c0_i32_0 : i32, i32, i32
  }
  func.func @transform_2(%arg0: i32) -> (i32, i32, i32) {
    %c0_i32 = arith.constant 0 : i32
    %c0_i32_0 = arith.constant 0 : i32
    %c0_i32_1 = arith.constant 0 : i32
    return %arg0, %c0_i32, %c0_i32_0 : i32, i32, i32
  }
  func.func @transform_3(%arg0: i32) -> (i32, i32) {
    %c0_i32 = arith.constant 0 : i32
    %c0_i32_0 = arith.constant 0 : i32
    return %arg0, %c0_i32 : i32, i32
  }
  func.func @transform_4(%arg0: i32) -> (i32, i32) {
    %c0_i32 = arith.constant 0 : i32
    %c0_i32_0 = arith.constant 0 : i32
    return %arg0, %c0_i32 : i32, i32
  }
}

</mosaic_0001>

<llo_original>
// kernel: keyp_head_forward.1
$region0: #{keyp_head_forward.1}
  #allocation0 [shape = 'u32[]', space=smem, size = 0x4, offset = 0x4, fixed_abs, tag = 'smem constant byte address 0x4 - core index']
  #allocation1 [shape = 'u32[72,128]{1,0:T(1,128)}', space=vmem, size = 0x9000, scoped, tag = 'internal scratch']
  %s0 = inlined_call_operand.vmem [shape: bf16[8,32], index: 0, kind: input, shape index: {}]
  %s1 = inlined_call_operand.vmem [shape: bf16[16,32,256], index: 1, kind: input, shape index: {}]
  %s2 = inlined_call_operand.vmem [shape: f32[16,8,256], index: 2, kind: output, shape index: {0}]
  %s3 = inlined_call_operand.vmem [shape: s32[16,8], index: 3, kind: output, shape index: {1}]
  %s4 = inlined_call_operand.vmem [shape: f32[16,8], index: 4, kind: output, shape index: {2}]
  %5 = xla_tuple %s2, %s3, %s4
  %s6 = sld [smem:[#allocation0]]
  $region57: #{keyp_head_forward.1} parent=0
    _
  %s8 = ssub.s32 1, %s6
  %s9 = scalar_select 0, %s8, %s6
  loop: start=0, step=1, limit=4
  $region2: #{keyp_head_forward.1} parent=0 // loop_pre_header
    _
  $region3: #{keyp_head_forward.1} parent=0 // loop_header
    %s11 = sphi 0, %s15
    %p12 = scmp.ge.s32.totalorder %s11, 4
    %s19 = sphi 0, %s19
    %s21 = sphi 0, %s19
    %s22 = sphi 0, %s21
    %s36 = sphi 0, %s22
    %s42 = sphi 0, %s44
    %s45 = sphi 0, %s42
    %s46 = sphi 0, %s45
    %s62 = sphi 0, %s46
    %s68 = sphi 0, %s70
    %s71 = sphi 0, %s68
    %s72 = sphi 0, %s71
    %s88 = sphi 0, %s72
    %s94 = sphi 0, %s96
    %s97 = sphi 0, %s94
    %s98 = sphi 0, %s97
    %s114 = sphi 0, %s98
    %s120 = sphi 0, %s122
    %s123 = sphi 0, %s120
    %s124 = sphi 0, %s123
    %s140 = sphi 0, %s124
  $region4: #{keyp_head_forward.1} parent=0 // loop_header_branch
    %14 = sbr.rel (%p12) target = $region8
  $region5: #{keyp_head_forward.1} parent=0 // loop_body
    %s16 = ssub.s32 %s11, 1
    %s17 = ssub.s32 %s11, 2
    %s18 = sadd.s32 %s11, 1
    %s20 = sadd.s32 %s19, 1
    %p23 = scmp.eq.s32.totalorder %s11, 1
    %p24 = scmp.ne.s32.totalorder %s19, %s21
    %p25 = scmp.eq.s32.totalorder %s11, 0
    %p26 = por %p24, %p25
    %p27 = scmp.ne.s32.totalorder %s19, %s21
    %p28 = scmp.eq.s32.totalorder %s16, 1
    %p29 = por %p27, %p28
    %p30 = scmp.ne.s32.totalorder %s21, %s22
    %p31 = scmp.eq.s32.totalorder %s16, 0
    %p32 = por %p30, %p31
    %p33 = scmp.ne.s32.totalorder %s21, %s22
    %p34 = scmp.eq.s32.totalorder %s17, 1
    %p35 = por %p33, %p34
    %p37 = scmp.ne.s32.totalorder %s22, %s36
    %p38 = scmp.eq.s32.totalorder %s17, 0
    %p39 = por %p37, %p38
    %s40 = ssub.s32 %s11, %s18
    %p41 = scmp.eq.s32.totalorder %s40, 0
    %s43 = sadd.s32 %s42, 1
    %s44 = scalar_select %p41, %s42, %s43
    %p47 = pneg %p41
    %p48 = scmp.eq.s32.totalorder %s11, 1
    %p49 = por %p47, %p48
    %p50 = scmp.ne.s32.totalorder %s42, %s45
    %p51 = scmp.eq.s32.totalorder %s11, 0
    %p52 = por %p50, %p51
    %p53 = scmp.ne.s32.totalorder %s42, %s45
    %p54 = scmp.eq.s32.totalorder %s16, 1
    %p55 = por %p53, %p54
    %p56 = scmp.ne.s32.totalorder %s45, %s46
    %p57 = scmp.eq.s32.totalorder %s16, 0
    %p58 = por %p56, %p57
    %p59 = scmp.ne.s32.totalorder %s45, %s46
    %p60 = scmp.eq.s32.totalorder %s17, 1
    %p61 = por %p59, %p60
    %p63 = scmp.ne.s32.totalorder %s46, %s62
    %p64 = scmp.eq.s32.totalorder %s17, 0
    %p65 = por %p63, %p64
    %s66 = ssub.s32 %s11, %s18
    %p67 = scmp.eq.s32.totalorder %s66, 0
    %s69 = sadd.s32 %s68, 1
    %s70 = scalar_select %p67, %s68, %s69
    %p73 = pneg %p67
    %p74 = scmp.eq.s32.totalorder %s11, 1
    %p75 = por %p73, %p74
    %p76 = scmp.ne.s32.totalorder %s68, %s71
    %p77 = scmp.eq.s32.totalorder %s11, 0
    %p78 = por %p76, %p77
    %p79 = scmp.ne.s32.totalorder %s68, %s71
    %p80 = scmp.eq.s32.totalorder %s16, 1
    %p81 = por %p79, %p80
    %p82 = scmp.ne.s32.totalorder %s71, %s72
    %p83 = scmp.eq.s32.totalorder %s16, 0
    %p84 = por %p82, %p83
    %p85 = scmp.ne.s32.totalorder %s71, %s72
    %p86 = scmp.eq.s32.totalorder %s17, 1
    %p87 = por %p85, %p86
    %p89 = scmp.ne.s32.totalorder %s72, %s88
    %p90 = scmp.eq.s32.totalorder %s17, 0
    %p91 = por %p89, %p90
    %s92 = ssub.s32 %s11, %s18
    %p93 = scmp.eq.s32.totalorder %s92, 0
    %s95 = sadd.s32 %s94, 1
    %s96 = scalar_select %p93, %s94, %s95
    %p99 = pneg %p93
    %p100 = scmp.eq.s32.totalorder %s11, 1
    %p101 = por %p99, %p100
    %p102 = scmp.ne.s32.totalorder %s94, %s97
    %p103 = scmp.eq.s32.totalorder %s11, 0
    %p104 = por %p102, %p103
    %p105 = scmp.ne.s32.totalorder %s94, %s97
    %p106 = scmp.eq.s32.totalorder %s16, 1
    %p107 = por %p105, %p106
    %p108 = scmp.ne.s32.totalorder %s97, %s98
    %p109 = scmp.eq.s32.totalorder %s16, 0
    %p110 = por %p108, %p109
    %p111 = scmp.ne.s32.totalorder %s97, %s98
    %p112 = scmp.eq.s32.totalorder %s17, 1
    %p113 = por %p111, %p112
    %p115 = scmp.ne.s32.totalorder %s98, %s114
    %p116 = scmp.eq.s32.totalorder %s17, 0
    %p117 = por %p115, %p116
    %s118 = ssub.s32 %s11, %s18
    %p119 = scmp.eq.s32.totalorder %s118, 0
    %s121 = sadd.s32 %s120, 1
    %s122 = scalar_select %p119, %s120, %s121
    %p125 = pneg %p119
    %p126 = scmp.eq.s32.totalorder %s11, 1
    %p127 = por %p125, %p126
    %p128 = scmp.ne.s32.totalorder %s120, %s123
    %p129 = scmp.eq.s32.totalorder %s11, 0
    %p130 = por %p128, %p129
    %p131 = scmp.ne.s32.totalorder %s120, %s123
    %p132 = scmp.eq.s32.totalorder %s16, 1
    %p133 = por %p131, %p132
    %p134 = scmp.ne.s32.totalorder %s123, %s124
    %p135 = scmp.eq.s32.totalorder %s16, 0
    %p136 = por %p134, %p135
    %p137 = scmp.ne.s32.totalorder %s123, %s124
    %p138 = scmp.eq.s32.totalorder %s17, 1
    %p139 = por %p137, %p138
    %p141 = scmp.ne.s32.totalorder %s124, %s140
    %p142 = scmp.eq.s32.totalorder %s17, 0
    %p143 = por %p141, %p142
    %p144 = scmp.le.s32.totalorder 1, %s11
    %p145 = scmp.lt.s32.totalorder %s11, 3
    %p146 = pnand %p144, %p145
    %p147 = pneg %p146
    // Predicated region
    $region9: #{keyp_head_forward.1} parent=5 // pred_check
      _
    $region10: #{keyp_head_forward.1} parent=5 // pred_check_branch
      %149 = sbr.rel (%p146) target = $region12
    $region11: #{keyp_head_forward.1} parent=5 // pred_region
      %s150 = ssub.s32 %s11, 1
      // Predicated region
      $region13: #{keyp_head_forward.1} parent=11 // pred_check
        %p151 = pneg %p32
      $region14: #{keyp_head_forward.1} parent=11 // pred_check_branch
        %153 = sbr.rel (%p151) target = $region16
      $region15: #{keyp_head_forward.1} parent=11 // pred_region
        _
      $region16: #{keyp_head_forward.1} parent=11 // pred_fallthru
        _
    $region12: #{keyp_head_forward.1} parent=5 // pred_fallthru
      _
    %p154 = scmp.lt.s32.totalorder %s11, 2
    // Predicated region
    $region17: #{keyp_head_forward.1} parent=5 // pred_check
      %p155 = pneg %p154
    $region18: #{keyp_head_forward.1} parent=5 // pred_check_branch
      %157 = sbr.rel (%p155) target = $region20
    $region19: #{keyp_head_forward.1} parent=5 // pred_region
      // Predicated region
      $region21: #{keyp_head_forward.1} parent=19 // pred_check
        %p158 = pneg %p52
      $region22: #{keyp_head_forward.1} parent=19 // pred_check_branch
        %160 = sbr.rel (%p158) target = $region24
      $region23: #{keyp_head_forward.1} parent=19 // pred_region
        %s161 = smul.u32 8, %s11
        %p162 = scmp.lt.s32.totalorder %s161, 15
        %s163 = scalar_select %p162, %s161, 15
        %s164 = smul.addr %s163, 8
        %s165 = smul.addr %s164, 4
        %s166 = scalar_lea.vmem %s1, %s165
        %s167 = smul.u32 8, %s11
      $region24: #{keyp_head_forward.1} parent=19 // pred_fallthru
        _
    $region20: #{keyp_head_forward.1} parent=5 // pred_fallthru
      _
    %p168 = scmp.le.s32.totalorder 1, %s11
    %p169 = scmp.lt.s32.totalorder %s11, 3
    %p170 = pnand %p168, %p169
    %p171 = pneg %p170
    // Predicated region
    $region25: #{keyp_head_forward.1} parent=5 // pred_check
      _
    $region26: #{keyp_head_forward.1} parent=5 // pred_check_branch
      %173 = sbr.rel (%p170) target = $region28
    $region27: #{keyp_head_forward.1} parent=5 // pred_region
      %s174 = ssub.s32 %s11, 1
      %p175 = pneg %p32
      %p176 = pneg %p29
      %s177 = smul.u32 8, %s16
      %p178 = scmp.lt.s32.totalorder %s177, 15
      %s179 = scalar_select %p178, %s177, 15
      %s180 = smul.addr %s179, 8
      %s181 = smul.addr %s180, 4
      %s182 = scalar_lea.vmem %s1, %s181
      %p183 = pneg %p58
      %p184 = pneg %p55
      %p185 = pneg %p84
      %p186 = pneg %p81
      %s187 = smul.u32 8, %s16
      %p188 = scmp.lt.s32.totalorder %s187, 15
      %s189 = scalar_select %p188, %s187, 15
      %s190 = smul.addr %s189, 2
      %s191 = smul.addr %s190, 8
      %s192 = scalar_lea.vmem %s2, %s191
      %p193 = pneg %p110
      %p194 = pneg %p107
      %p195 = scmp.lt.s32.totalorder %s16, 1
      %s196 = scalar_select %p195, %s16, 1
      %s197 = smul.addr %s196, 8
      %s198 = scalar_lea.vmem %s3, %s197
      %p199 = pneg %p136
      %p200 = pneg %p133
      %p201 = scmp.lt.s32.totalorder %s16, 1
      %s202 = scalar_select %p201, %s16, 1
      %s203 = smul.addr %s202, 8
      %s204 = scalar_lea.vmem %s4, %s203
      %s205 = smul.u32 8, %s16
      %p206 = scmp.lt.s32.totalorder %s205, 15
      %s207 = scalar_select %p206, %s205, 15
      %s208 = smul.addr %s207, 8
      %s209 = smul.addr %s208, 4
      %s210 = scalar_lea.vmem %s1, %s209
      %s211 = smul.u32 8, %s16
      %s212 = smul.u32 8, %s16
      %p213 = scmp.lt.s32.totalorder %s212, 15
      %s214 = scalar_select %p213, %s212, 15
      %s215 = smul.addr %s214, 2
      %s216 = smul.addr %s215, 8
      %s217 = scalar_lea.vmem %s2, %s216
      %s218 = smul.u32 8, %s16
      %p219 = scmp.lt.s32.totalorder %s16, 1
      %s220 = scalar_select %p219, %s16, 1
      %s221 = smul.addr %s220, 8
      %s222 = scalar_lea.vmem %s3, %s221
      %p223 = scmp.lt.s32.totalorder %s16, 1
      %s224 = scalar_select %p223, %s16, 1
      %s225 = smul.addr %s224, 8
      %s226 = scalar_lea.vmem %s4, %s225
      %v228 = vld [vmem:[%s210] sm:$0xff]
      %v229 = vld [vmem:[%s210 + $0x8] sm:$0xff]
      %v230 = vld [vmem:[%s210 + $0x10] sm:$0xff]
      %v231 = vld [vmem:[%s210 + $0x18] sm:$0xff]
      %v232 = vld [vmem:[%s210 + $0x20] sm:$0xff]
      %v233 = vld [vmem:[%s210 + $0x28] sm:$0xff]
      %v234 = vld [vmem:[%s210 + $0x30] sm:$0xff]
      %v235 = vld [vmem:[%s210 + $0x38] sm:$0xff]
      %v236 = vld [vmem:[%s210 + $0x40] sm:$0xff]
      %v237 = vld [vmem:[%s210 + $0x48] sm:$0xff]
      %v238 = vld [vmem:[%s210 + $0x50] sm:$0xff]
      %v239 = vld [vmem:[%s210 + $0x58] sm:$0xff]
      %v240 = vld [vmem:[%s210 + $0x60] sm:$0xff]
      %v241 = vld [vmem:[%s210 + $0x68] sm:$0xff]
      %v242 = vld [vmem:[%s210 + $0x70] sm:$0xff]
      %v243 = vld [vmem:[%s210 + $0x78] sm:$0xff]
      %v244 = vld [vmem:[%s210 + $0x80] sm:$0xff]
      %v245 = vld [vmem:[%s210 + $0x88] sm:$0xff]
      %v246 = vld [vmem:[%s210 + $0x90] sm:$0xff]
      %v247 = vld [vmem:[%s210 + $0x98] sm:$0xff]
      %v248 = vld [vmem:[%s210 + $0xa0] sm:$0xff]
      %v249 = vld [vmem:[%s210 + $0xa8] sm:$0xff]
      %v250 = vld [vmem:[%s210 + $0xb0] sm:$0xff]
      %v251 = vld [vmem:[%s210 + $0xb8] sm:$0xff]
      %v252 = vld [vmem:[%s210 + $0xc0] sm:$0xff]
      %v253 = vld [vmem:[%s210 + $0xc8] sm:$0xff]
      %v254 = vld [vmem:[%s210 + $0xd0] sm:$0xff]
      %v255 = vld [vmem:[%s210 + $0xd8] sm:$0xff]
      %v256 = vld [vmem:[%s210 + $0xe0] sm:$0xff]
      %v257 = vld [vmem:[%s210 + $0xe8] sm:$0xff]
      %v258 = vld [vmem:[%s210 + $0xf0] sm:$0xff]
      %v259 = vld [vmem:[%s210 + $0xf8] sm:$0xff]
      %v260 = vld [vmem:[%s0] sm:$0xf]
      %v265 = vunpack.c.l.b16 %v228
      %v266 = vunpack.c.h.b16 %v228
      %v267 = vunpack.c.l.b16 %v229
      %v268 = vunpack.c.h.b16 %v229
      %v269 = vunpack.c.l.b16 %v230
      %v270 = vunpack.c.h.b16 %v230
      %v271 = vunpack.c.l.b16 %v231
      %v272 = vunpack.c.h.b16 %v231
      %v273 = vpack.c.b16 %v267, %v265
      %v274 = vpack.c.b16 %v268, %v266
      %v275 = vpack.c.b16 %v271, %v269
      %v276 = vpack.c.b16 %v272, %v270
      %vm281 = vcmask 261120
      %v283 = vsel %vm281, %v260, 0
      %285 = vmatpush.bf16.msra.mxu0 0
      %286 = vmatpush.bf16.msra.mxu0 0
      %287 = vmatpush.bf16.msra.mxu0 0
      %288 = vmatpush.bf16.msra.mxu0 0
      %289 = vmatpush.bf16.msra.mxu0 0
      %290 = vmatpush.bf16.msra.mxu0 0
      %291 = vmatpush.bf16.msra.mxu0 %v275
      %292 = vmatpush.bf16.msra.mxu0 %v273
      %293 = vmatmul.bf16.gmra.mxu0 %v283
      %v294 = vpop.f32.mrf.mxu0
      %v295 = vadd.f32 0.0, %v294
      %v296 = vpop.f32.mrf.mxu0
      %297 = vdwg.mxu0
      %298 = vmatpush.bf16.msra.mxu0 0
      %299 = vmatpush.bf16.msra.mxu0 0
      %300 = vmatpush.bf16.msra.mxu0 0
      %301 = vmatpush.bf16.msra.mxu0 0
      %302 = vmatpush.bf16.msra.mxu0 0
      %303 = vmatpush.bf16.msra.mxu0 0
      %304 = vmatpush.bf16.msra.mxu0 %v276
      %305 = vmatpush.bf16.msra.mxu0 %v274
      %306 = vmatmul.bf16.gmra.mxu0 %v283
      %v307 = vpop.f32.mrf.mxu0
      %v308 = vadd.f32 0.0, %v307
      %v309 = vpop.f32.mrf.mxu0
      %310 = vdwg.mxu0
      %v315 = vunpack.c.l.b16 %v232
      %v316 = vunpack.c.h.b16 %v232
      %v317 = vunpack.c.l.b16 %v233
      %v318 = vunpack.c.h.b16 %v233
      %v319 = vunpack.c.l.b16 %v234
      %v320 = vunpack.c.h.b16 %v234
      %v321 = vunpack.c.l.b16 %v235
      %v322 = vunpack.c.h.b16 %v235
      %v323 = vpack.c.b16 %v317, %v315
      %v324 = vpack.c.b16 %v318, %v316
      %v325 = vpack.c.b16 %v321, %v319
      %v326 = vpack.c.b16 %v322, %v320
      %331 = vmatpush.bf16.msra.mxu0 0
      %332 = vmatpush.bf16.msra.mxu0 0
      %333 = vmatpush.bf16.msra.mxu0 0
      %334 = vmatpush.bf16.msra.mxu0 0
      %335 = vmatpush.bf16.msra.mxu0 0
      %336 = vmatpush.bf16.msra.mxu0 0
      %337 = vmatpush.bf16.msra.mxu0 %v325
      %338 = vmatpush.bf16.msra.mxu0 %v323
      %339 = vmatmul.bf16.gmra.mxu0 %v283
      %v340 = vpop.f32.mrf.mxu0
      %v341 = vadd.f32 0.0, %v340
      %v342 = vpop.f32.mrf.mxu0
      %343 = vdwg.mxu0
      %344 = vmatpush.bf16.msra.mxu0 0
      %345 = vmatpush.bf16.msra.mxu0 0
      %346 = vmatpush.bf16.msra.mxu0 0
      %347 = vmatpush.bf16.msra.mxu0 0
      %348 = vmatpush.bf16.msra.mxu0 0
      %349 = vmatpush.bf16.msra.mxu0 0
      %350 = vmatpush.bf16.msra.mxu0 %v326
      %351 = vmatpush.bf16.msra.mxu0 %v324
      %352 = vmatmul.bf16.gmra.mxu0 %v283
      %v353 = vpop.f32.mrf.mxu0
      %v354 = vadd.f32 0.0, %v353
      %v355 = vpop.f32.mrf.mxu0
      %356 = vdwg.mxu0
      %v361 = vunpack.c.l.b16 %v236
      %v362 = vunpack.c.h.b16 %v236
      %v363 = vunpack.c.l.b16 %v237
      %v364 = vunpack.c.h.b16 %v237
      %v365 = vunpack.c.l.b16 %v238
      %v366 = vunpack.c.h.b16 %v238
      %v367 = vunpack.c.l.b16 %v239
      %v368 = vunpack.c.h.b16 %v239
      %v369 = vpack.c.b16 %v363, %v361
      %v370 = vpack.c.b16 %v364, %v362
      %v371 = vpack.c.b16 %v367, %v365
      %v372 = vpack.c.b16 %v368, %v366
      %377 = vmatpush.bf16.msra.mxu0 0
      %378 = vmatpush.bf16.msra.mxu0 0
      %379 = vmatpush.bf16.msra.mxu0 0
      %380 = vmatpush.bf16.msra.mxu0 0
      %381 = vmatpush.bf16.msra.mxu0 0
      %382 = vmatpush.bf16.msra.mxu0 0
      %383 = vmatpush.bf16.msra.mxu0 %v371
      %384 = vmatpush.bf16.msra.mxu0 %v369
      %385 = vmatmul.bf16.gmra.mxu0 %v283
      %v386 = vpop.f32.mrf.mxu0
      %v387 = vadd.f32 0.0, %v386
      %v388 = vpop.f32.mrf.mxu0
      %389 = vdwg.mxu0
      %390 = vmatpush.bf16.msra.mxu0 0
      %391 = vmatpush.bf16.msra.mxu0 0
      %392 = vmatpush.bf16.msra.mxu0 0
      %393 = vmatpush.bf16.msra.mxu0 0
      %394 = vmatpush.bf16.msra.mxu0 0
      %395 = vmatpush.bf16.msra.mxu0 0
      %396 = vmatpush.bf16.msra.mxu0 %v372
      %397 = vmatpush.bf16.msra.mxu0 %v370
      %398 = vmatmul.bf16.gmra.mxu0 %v283
      %v399 = vpop.f32.mrf.mxu0
      %v400 = vadd.f32 0.0, %v399
      %v401 = vpop.f32.mrf.mxu0
      %402 = vdwg.mxu0
      %v407 = vunpack.c.l.b16 %v240
      %v408 = vunpack.c.h.b16 %v240
      %v409 = vunpack.c.l.b16 %v241
      %v410 = vunpack.c.h.b16 %v241
      %v411 = vunpack.c.l.b16 %v242
      %v412 = vunpack.c.h.b16 %v242
      %v413 = vunpack.c.l.b16 %v243
      %v414 = vunpack.c.h.b16 %v243
      %v415 = vpack.c.b16 %v409, %v407
      %v416 = vpack.c.b16 %v410, %v408
      %v417 = vpack.c.b16 %v413, %v411
      %v418 = vpack.c.b16 %v414, %v412
      %423 = vmatpush.bf16.msra.mxu0 0
      %424 = vmatpush.bf16.msra.mxu0 0
      %425 = vmatpush.bf16.msra.mxu0 0
      %426 = vmatpush.bf16.msra.mxu0 0
      %427 = vmatpush.bf16.msra.mxu0 0
      %428 = vmatpush.bf16.msra.mxu0 0
      %429 = vmatpush.bf16.msra.mxu0 %v417
      %430 = vmatpush.bf16.msra.mxu0 %v415
      %431 = vmatmul.bf16.gmra.mxu0 %v283
      %v432 = vpop.f32.mrf.mxu0
      %v433 = vadd.f32 0.0, %v432
      %v434 = vpop.f32.mrf.mxu0
      %435 = vdwg.mxu0
      %436 = vmatpush.bf16.msra.mxu0 0
      %437 = vmatpush.bf16.msra.mxu0 0
      %438 = vmatpush.bf16.msra.mxu0 0
      %439 = vmatpush.bf16.msra.mxu0 0
      %440 = vmatpush.bf16.msra.mxu0 0
      %441 = vmatpush.bf16.msra.mxu0 0
      %442 = vmatpush.bf16.msra.mxu0 %v418
      %443 = vmatpush.bf16.msra.mxu0 %v416
      %444 = vmatmul.bf16.gmra.mxu0 %v283
      %v445 = vpop.f32.mrf.mxu0
      %v446 = vadd.f32 0.0, %v445
      %v447 = vpop.f32.mrf.mxu0
      %448 = vdwg.mxu0
      %v453 = vunpack.c.l.b16 %v244
      %v454 = vunpack.c.h.b16 %v244
      %v455 = vunpack.c.l.b16 %v245
      %v456 = vunpack.c.h.b16 %v245
      %v457 = vunpack.c.l.b16 %v246
      %v458 = vunpack.c.h.b16 %v246
      %v459 = vunpack.c.l.b16 %v247
      %v460 = vunpack.c.h.b16 %v247
      %v461 = vpack.c.b16 %v455, %v453
      %v462 = vpack.c.b16 %v456, %v454
      %v463 = vpack.c.b16 %v459, %v457
      %v464 = vpack.c.b16 %v460, %v458
      %469 = vmatpush.bf16.msra.mxu0 0
      %470 = vmatpush.bf16.msra.mxu0 0
      %471 = vmatpush.bf16.msra.mxu0 0
      %472 = vmatpush.bf16.msra.mxu0 0
      %473 = vmatpush.bf16.msra.mxu0 0
      %474 = vmatpush.bf16.msra.mxu0 0
      %475 = vmatpush.bf16.msra.mxu0 %v463
      %476 = vmatpush.bf16.msra.mxu0 %v461
      %477 = vmatmul.bf16.gmra.mxu0 %v283
      %v478 = vpop.f32.mrf.mxu0
      %v479 = vadd.f32 0.0, %v478
      %v480 = vpop.f32.mrf.mxu0
      %481 = vdwg.mxu0
      %482 = vmatpush.bf16.msra.mxu0 0
      %483 = vmatpush.bf16.msra.mxu0 0
      %484 = vmatpush.bf16.msra.mxu0 0
      %485 = vmatpush.bf16.msra.mxu0 0
      %486 = vmatpush.bf16.msra.mxu0 0
      %487 = vmatpush.bf16.msra.mxu0 0
      %488 = vmatpush.bf16.msra.mxu0 %v464
      %489 = vmatpush.bf16.msra.mxu0 %v462
      %490 = vmatmul.bf16.gmra.mxu0 %v283
      %v491 = vpop.f32.mrf.mxu0
      %v492 = vadd.f32 0.0, %v491
      %v493 = vpop.f32.mrf.mxu0
      %494 = vdwg.mxu0
      %v499 = vunpack.c.l.b16 %v248
      %v500 = vunpack.c.h.b16 %v248
      %v501 = vunpack.c.l.b16 %v249
      %v502 = vunpack.c.h.b16 %v249
      %v503 = vunpack.c.l.b16 %v250
      %v504 = vunpack.c.h.b16 %v250
      %v505 = vunpack.c.l.b16 %v251
      %v506 = vunpack.c.h.b16 %v251
      %v507 = vpack.c.b16 %v501, %v499
      %v508 = vpack.c.b16 %v502, %v500
      %v509 = vpack.c.b16 %v505, %v503
      %v510 = vpack.c.b16 %v506, %v504
      %515 = vmatpush.bf16.msra.mxu0 0
      %516 = vmatpush.bf16.msra.mxu0 0
      %517 = vmatpush.bf16.msra.mxu0 0
      %518 = vmatpush.bf16.msra.mxu0 0
      %519 = vmatpush.bf16.msra.mxu0 0
      %520 = vmatpush.bf16.msra.mxu0 0
      %521 = vmatpush.bf16.msra.mxu0 %v509
      %522 = vmatpush.bf16.msra.mxu0 %v507
      %523 = vmatmul.bf16.gmra.mxu0 %v283
      %v524 = vpop.f32.mrf.mxu0
      %v525 = vadd.f32 0.0, %v524
      %v526 = vpop.f32.mrf.mxu0
      %527 = vdwg.mxu0
      %528 = vmatpush.bf16.msra.mxu0 0
      %529 = vmatpush.bf16.msra.mxu0 0
      %530 = vmatpush.bf16.msra.mxu0 0
      %531 = vmatpush.bf16.msra.mxu0 0
      %532 = vmatpush.bf16.msra.mxu0 0
      %533 = vmatpush.bf16.msra.mxu0 0
      %534 = vmatpush.bf16.msra.mxu0 %v510
      %535 = vmatpush.bf16.msra.mxu0 %v508
      %536 = vmatmul.bf16.gmra.mxu0 %v283
      %v537 = vpop.f32.mrf.mxu0
      %v538 = vadd.f32 0.0, %v537
      %v539 = vpop.f32.mrf.mxu0
      %540 = vdwg.mxu0
      %v545 = vunpack.c.l.b16 %v252
      %v546 = vunpack.c.h.b16 %v252
      %v547 = vunpack.c.l.b16 %v253
      %v548 = vunpack.c.h.b16 %v253
      %v549 = vunpack.c.l.b16 %v254
      %v550 = vunpack.c.h.b16 %v254
      %v551 = vunpack.c.l.b16 %v255
      %v552 = vunpack.c.h.b16 %v255
      %v553 = vpack.c.b16 %v547, %v545
      %v554 = vpack.c.b16 %v548, %v546
      %v555 = vpack.c.b16 %v551, %v549
      %v556 = vpack.c.b16 %v552, %v550
      %561 = vmatpush.bf16.msra.mxu0 0
      %562 = vmatpush.bf16.msra.mxu0 0
      %563 = vmatpush.bf16.msra.mxu0 0
      %564 = vmatpush.bf16.msra.mxu0 0
      %565 = vmatpush.bf16.msra.mxu0 0
      %566 = vmatpush.bf16.msra.mxu0 0
      %567 = vmatpush.bf16.msra.mxu0 %v555
      %568 = vmatpush.bf16.msra.mxu0 %v553
      %569 = vmatmul.bf16.gmra.mxu0 %v283
      %v570 = vpop.f32.mrf.mxu0
      %v571 = vadd.f32 0.0, %v570
      %v572 = vpop.f32.mrf.mxu0
      %573 = vdwg.mxu0
      %574 = vmatpush.bf16.msra.mxu0 0
      %575 = vmatpush.bf16.msra.mxu0 0
      %576 = vmatpush.bf16.msra.mxu0 0
      %577 = vmatpush.bf16.msra.mxu0 0
      %578 = vmatpush.bf16.msra.mxu0 0
      %579 = vmatpush.bf16.msra.mxu0 0
      %580 = vmatpush.bf16.msra.mxu0 %v556
      %581 = vmatpush.bf16.msra.mxu0 %v554
      %582 = vmatmul.bf16.gmra.mxu0 %v283
      %v583 = vpop.f32.mrf.mxu0
      %v584 = vadd.f32 0.0, %v583
      %v585 = vpop.f32.mrf.mxu0
      %586 = vdwg.mxu0
      %v591 = vunpack.c.l.b16 %v256
      %v592 = vunpack.c.h.b16 %v256
      %v593 = vunpack.c.l.b16 %v257
      %v594 = vunpack.c.h.b16 %v257
      %v595 = vunpack.c.l.b16 %v258
      %v596 = vunpack.c.h.b16 %v258
      %v597 = vunpack.c.l.b16 %v259
      %v598 = vunpack.c.h.b16 %v259
      %v599 = vpack.c.b16 %v593, %v591
      %v600 = vpack.c.b16 %v594, %v592
      %v601 = vpack.c.b16 %v597, %v595
      %v602 = vpack.c.b16 %v598, %v596
      %607 = vmatpush.bf16.msra.mxu0 0
      %608 = vmatpush.bf16.msra.mxu0 0
      %609 = vmatpush.bf16.msra.mxu0 0
      %610 = vmatpush.bf16.msra.mxu0 0
      %611 = vmatpush.bf16.msra.mxu0 0
      %612 = vmatpush.bf16.msra.mxu0 0
      %613 = vmatpush.bf16.msra.mxu0 %v601
      %614 = vmatpush.bf16.msra.mxu0 %v599
      %615 = vmatmul.bf16.gmra.mxu0 %v283
      %v616 = vpop.f32.mrf.mxu0
      %v617 = vadd.f32 0.0, %v616
      %v618 = vpop.f32.mrf.mxu0
      %619 = vdwg.mxu0
      %620 = vmatpush.bf16.msra.mxu0 0
      %621 = vmatpush.bf16.msra.mxu0 0
      %622 = vmatpush.bf16.msra.mxu0 0
      %623 = vmatpush.bf16.msra.mxu0 0
      %624 = vmatpush.bf16.msra.mxu0 0
      %625 = vmatpush.bf16.msra.mxu0 0
      %626 = vmatpush.bf16.msra.mxu0 %v602
      %627 = vmatpush.bf16.msra.mxu0 %v600
      %628 = vmatmul.bf16.gmra.mxu0 %v283
      %v629 = vpop.f32.mrf.mxu0
      %v630 = vadd.f32 0.0, %v629
      %v631 = vpop.f32.mrf.mxu0
      %632 = vdwg.mxu0
      %v633 = vlaneseq
      %v634 = vand.u32 %v633, 127
      %v635 = vadd.s32 %v634, 128
      %v636 = vmax.f32 %v295, %v308
      %637 = vmax.xlane.f32.xlu0 %v636
      %v638 = vpop.xlane.xlu0 %637
      %v639 = vmax.f32 %v341, %v354
      %640 = vmax.xlane.f32.xlu0 %v639
      %v641 = vpop.xlane.xlu0 %640
      %v642 = vmax.f32 %v387, %v400
      %643 = vmax.xlane.f32.xlu0 %v642
      %v644 = vpop.xlane.xlu0 %643
      %v645 = vmax.f32 %v433, %v446
      %646 = vmax.xlane.f32.xlu0 %v645
      %v647 = vpop.xlane.xlu0 %646
      %v648 = vmax.f32 %v479, %v492
      %649 = vmax.xlane.f32.xlu0 %v648
      %v650 = vpop.xlane.xlu0 %649
      %v651 = vmax.f32 %v525, %v538
      %652 = vmax.xlane.f32.xlu0 %v651
      %v653 = vpop.xlane.xlu0 %652
      %v654 = vmax.f32 %v571, %v584
      %655 = vmax.xlane.f32.xlu0 %v654
      %v656 = vpop.xlane.xlu0 %655
      %v657 = vmax.f32 %v617, %v630
      %658 = vmax.xlane.f32.xlu0 %v657
      %v659 = vpop.xlane.xlu0 %658
      %v660 = vsub.f32 %v295, %v638
      %v661 = vsub.f32 %v308, %v638
      %v662 = vsub.f32 %v341, %v641
      %v663 = vsub.f32 %v354, %v641
      %v664 = vsub.f32 %v387, %v644
      %v665 = vsub.f32 %v400, %v644
      %v666 = vsub.f32 %v433, %v647
      %v667 = vsub.f32 %v446, %v647
      %v668 = vsub.f32 %v479, %v650
      %v669 = vsub.f32 %v492, %v650
      %v670 = vsub.f32 %v525, %v653
      %v671 = vsub.f32 %v538, %v653
      %v672 = vsub.f32 %v571, %v656
      %v673 = vsub.f32 %v584, %v656
      %v674 = vsub.f32 %v617, %v659
      %v675 = vsub.f32 %v630, %v659
      %v676 = vmul.f32 %v660, 1.442695
      %v677 = vpow.pop %v676
      %v678 = vmul.f32 %v661, 1.442695
      %v679 = vpow.pop %v678
      %v680 = vmul.f32 %v662, 1.442695
      %v681 = vpow.pop %v680
      %v682 = vmul.f32 %v663, 1.442695
      %v683 = vpow.pop %v682
      %v684 = vmul.f32 %v664, 1.442695
      %v685 = vpow.pop %v684
      %v686 = vmul.f32 %v665, 1.442695
      %v687 = vpow.pop %v686
      %v688 = vmul.f32 %v666, 1.442695
      %v689 = vpow.pop %v688
      %v690 = vmul.f32 %v667, 1.442695
      %v691 = vpow.pop %v690
      %v692 = vmul.f32 %v668, 1.442695
      %v693 = vpow.pop %v692
      %v694 = vmul.f32 %v669, 1.442695
      %v695 = vpow.pop %v694
      %v696 = vmul.f32 %v670, 1.442695
      %v697 = vpow.pop %v696
      %v698 = vmul.f32 %v671, 1.442695
      %v699 = vpow.pop %v698
      %v700 = vmul.f32 %v672, 1.442695
      %v701 = vpow.pop %v700
      %v702 = vmul.f32 %v673, 1.442695
      %v703 = vpow.pop %v702
      %v704 = vmul.f32 %v674, 1.442695
      %v705 = vpow.pop %v704
      %v706 = vmul.f32 %v675, 1.442695
      %v707 = vpow.pop %v706
      %v708 = vadd.f32 %v677, %v679
      %709 = vadd.xlane.f32.xlu0 %v708
      %v710 = vpop.xlane.xlu0 %709
      %v711 = vadd.f32 %v681, %v683
      %712 = vadd.xlane.f32.xlu0 %v711
      %v713 = vpop.xlane.xlu0 %712
      %v714 = vadd.f32 %v685, %v687
      %715 = vadd.xlane.f32.xlu0 %v714
      %v716 = vpop.xlane.xlu0 %715
      %v717 = vadd.f32 %v689, %v691
      %718 = vadd.xlane.f32.xlu0 %v717
      %v719 = vpop.xlane.xlu0 %718
      %v720 = vadd.f32 %v693, %v695
      %721 = vadd.xlane.f32.xlu0 %v720
      %v722 = vpop.xlane.xlu0 %721
      %v723 = vadd.f32 %v697, %v699
      %724 = vadd.xlane.f32.xlu0 %v723
      %v725 = vpop.xlane.xlu0 %724
      %v726 = vadd.f32 %v701, %v703
      %727 = vadd.xlane.f32.xlu0 %v726
      %v728 = vpop.xlane.xlu0 %727
      %v729 = vadd.f32 %v705, %v707
      %730 = vadd.xlane.f32.xlu0 %v729
      %v731 = vpop.xlane.xlu0 %730
      %v732 = vrcp.pop %v710
      %v733 = vmul.f32 %v710, %v732
      %v734 = vsub.f32 1.0, %v733
      %v735 = vmul.f32 %v732, %v734
      %v736 = vadd.f32 %v732, %v735
      %vm737 = vweird.f32 %v710
      %vm738 = vweird.f32 %v732
      %vm739 = vmor %vm737, %vm738
      %v740 = vsel %vm739, %v732, %v736
      %v741 = vand.u32 2147483647, %v710
      %vm742 = vcmp.eq.f32.partialorder %v741, 8.507059e+37
      %v743 = vand.u32 %v710, 2147483648
      %v744 = vor.u32 1.1754944e-38, %v743
      %v745 = vsel %vm742, %v744, %v740
      %v746 = vmul.f32 1.0, %v745
      %v747 = vrcp.pop %v713
      %v748 = vmul.f32 %v713, %v747
      %v749 = vsub.f32 1.0, %v748
      %v750 = vmul.f32 %v747, %v749
      %v751 = vadd.f32 %v747, %v750
      %vm752 = vweird.f32 %v713
      %vm753 = vweird.f32 %v747
      %vm754 = vmor %vm752, %vm753
      %v755 = vsel %vm754, %v747, %v751
      %v756 = vand.u32 2147483647, %v713
      %vm757 = vcmp.eq.f32.partialorder %v756, 8.507059e+37
      %v758 = vand.u32 %v713, 2147483648
      %v759 = vor.u32 1.1754944e-38, %v758
      %v760 = vsel %vm757, %v759, %v755
      %v761 = vmul.f32 1.0, %v760
      %v762 = vrcp.pop %v716
      %v763 = vmul.f32 %v716, %v762
      %v764 = vsub.f32 1.0, %v763
      %v765 = vmul.f32 %v762, %v764
      %v766 = vadd.f32 %v762, %v765
      %vm767 = vweird.f32 %v716
      %vm768 = vweird.f32 %v762
      %vm769 = vmor %vm767, %vm768
      %v770 = vsel %vm769, %v762, %v766
      %v771 = vand.u32 2147483647, %v716
      %vm772 = vcmp.eq.f32.partialorder %v771, 8.507059e+37
      %v773 = vand.u32 %v716, 2147483648
      %v774 = vor.u32 1.1754944e-38, %v773
      %v775 = vsel %vm772, %v774, %v770
      %v776 = vmul.f32 1.0, %v775
      %v777 = vrcp.pop %v719
      %v778 = vmul.f32 %v719, %v777
      %v779 = vsub.f32 1.0, %v778
      %v780 = vmul.f32 %v777, %v779
      %v781 = vadd.f32 %v777, %v780
      %vm782 = vweird.f32 %v719
      %vm783 = vweird.f32 %v777
      %vm784 = vmor %vm782, %vm783
      %v785 = vsel %vm784, %v777, %v781
      %v786 = vand.u32 2147483647, %v719
      %vm787 = vcmp.eq.f32.partialorder %v786, 8.507059e+37
      %v788 = vand.u32 %v719, 2147483648
      %v789 = vor.u32 1.1754944e-38, %v788
      %v790 = vsel %vm787, %v789, %v785
      %v791 = vmul.f32 1.0, %v790
      %v792 = vrcp.pop %v722
      %v793 = vmul.f32 %v722, %v792
      %v794 = vsub.f32 1.0, %v793
      %v795 = vmul.f32 %v792, %v794
      %v796 = vadd.f32 %v792, %v795
      %vm797 = vweird.f32 %v722
      %vm798 = vweird.f32 %v792
      %vm799 = vmor %vm797, %vm798
      %v800 = vsel %vm799, %v792, %v796
      %v801 = vand.u32 2147483647, %v722
      %vm802 = vcmp.eq.f32.partialorder %v801, 8.507059e+37
      %v803 = vand.u32 %v722, 2147483648
      %v804 = vor.u32 1.1754944e-38, %v803
      %v805 = vsel %vm802, %v804, %v800
      %v806 = vmul.f32 1.0, %v805
      %v807 = vrcp.pop %v725
      %v808 = vmul.f32 %v725, %v807
      %v809 = vsub.f32 1.0, %v808
      %v810 = vmul.f32 %v807, %v809
      %v811 = vadd.f32 %v807, %v810
      %vm812 = vweird.f32 %v725
      %vm813 = vweird.f32 %v807
      %vm814 = vmor %vm812, %vm813
      %v815 = vsel %vm814, %v807, %v811
      %v816 = vand.u32 2147483647, %v725
      %vm817 = vcmp.eq.f32.partialorder %v816, 8.507059e+37
      %v818 = vand.u32 %v725, 2147483648
      %v819 = vor.u32 1.1754944e-38, %v818
      %v820 = vsel %vm817, %v819, %v815
      %v821 = vmul.f32 1.0, %v820
      %v822 = vrcp.pop %v728
      %v823 = vmul.f32 %v728, %v822
      %v824 = vsub.f32 1.0, %v823
      %v825 = vmul.f32 %v822, %v824
      %v826 = vadd.f32 %v822, %v825
      %vm827 = vweird.f32 %v728
      %vm828 = vweird.f32 %v822
      %vm829 = vmor %vm827, %vm828
      %v830 = vsel %vm829, %v822, %v826
      %v831 = vand.u32 2147483647, %v728
      %vm832 = vcmp.eq.f32.partialorder %v831, 8.507059e+37
      %v833 = vand.u32 %v728, 2147483648
      %v834 = vor.u32 1.1754944e-38, %v833
      %v835 = vsel %vm832, %v834, %v830
      %v836 = vmul.f32 1.0, %v835
      %v837 = vrcp.pop %v731
      %v838 = vmul.f32 %v731, %v837
      %v839 = vsub.f32 1.0, %v838
      %v840 = vmul.f32 %v837, %v839
      %v841 = vadd.f32 %v837, %v840
      %vm842 = vweird.f32 %v731
      %vm843 = vweird.f32 %v837
      %vm844 = vmor %vm842, %vm843
      %v845 = vsel %vm844, %v837, %v841
      %v846 = vand.u32 2147483647, %v731
      %vm847 = vcmp.eq.f32.partialorder %v846, 8.507059e+37
      %v848 = vand.u32 %v731, 2147483648
      %v849 = vor.u32 1.1754944e-38, %v848
      %v850 = vsel %vm847, %v849, %v845
      %v851 = vmul.f32 1.0, %v850
      %v852 = vmul.f32 %v677, %v746
      %v853 = vmul.f32 %v679, %v746
      %v854 = vmul.f32 %v681, %v761
      %v855 = vmul.f32 %v683, %v761
      %v856 = vmul.f32 %v685, %v776
      %v857 = vmul.f32 %v687, %v776
      %v858 = vmul.f32 %v689, %v791
      %v859 = vmul.f32 %v691, %v791
      %v860 = vmul.f32 %v693, %v806
      %v861 = vmul.f32 %v695, %v806
      %v862 = vmul.f32 %v697, %v821
      %v863 = vmul.f32 %v699, %v821
      %v864 = vmul.f32 %v701, %v836
      %v865 = vmul.f32 %v703, %v836
      %v866 = vmul.f32 %v705, %v851
      %v867 = vmul.f32 %v707, %v851
      %868 = vst [vmem:[%s217] sm:$0xff] %v852
      %869 = vst [vmem:[%s217 + $0x8] sm:$0xff] %v853
      %870 = vst [vmem:[%s217 + $0x10] sm:$0xff] %v854
      %871 = vst [vmem:[%s217 + $0x18] sm:$0xff] %v855
      %872 = vst [vmem:[%s217 + $0x20] sm:$0xff] %v856
      %873 = vst [vmem:[%s217 + $0x28] sm:$0xff] %v857
      %874 = vst [vmem:[%s217 + $0x30] sm:$0xff] %v858
      %875 = vst [vmem:[%s217 + $0x38] sm:$0xff] %v859
      %876 = vst [vmem:[%s217 + $0x40] sm:$0xff] %v860
      %877 = vst [vmem:[%s217 + $0x48] sm:$0xff] %v861
      %878 = vst [vmem:[%s217 + $0x50] sm:$0xff] %v862
      %879 = vst [vmem:[%s217 + $0x58] sm:$0xff] %v863
      %880 = vst [vmem:[%s217 + $0x60] sm:$0xff] %v864
      %881 = vst [vmem:[%s217 + $0x68] sm:$0xff] %v865
      %882 = vst [vmem:[%s217 + $0x70] sm:$0xff] %v866
      %883 = vst [vmem:[%s217 + $0x78] sm:$0xff] %v867
      %vm884 = vcmp.ge.f32.partialorder %v295, %v638
      %vm885 = vcmp.ge.f32.partialorder %v308, %v638
      %vm886 = vcmp.ge.f32.partialorder %v341, %v641
      %vm887 = vcmp.ge.f32.partialorder %v354, %v641
      %vm888 = vcmp.ge.f32.partialorder %v387, %v644
      %vm889 = vcmp.ge.f32.partialorder %v400, %v644
      %vm890 = vcmp.ge.f32.partialorder %v433, %v647
      %vm891 = vcmp.ge.f32.partialorder %v446, %v647
      %vm892 = vcmp.ge.f32.partialorder %v479, %v650
      %vm893 = vcmp.ge.f32.partialorder %v492, %v650
      %vm894 = vcmp.ge.f32.partialorder %v525, %v653
      %vm895 = vcmp.ge.f32.partialorder %v538, %v653
      %vm896 = vcmp.ge.f32.partialorder %v571, %v656
      %vm897 = vcmp.ge.f32.partialorder %v584, %v656
      %vm898 = vcmp.ge.f32.partialorder %v617, %v659
      %vm899 = vcmp.ge.f32.partialorder %v630, %v659
      %v900 = vsel %vm884, %v634, 256
      %v901 = vsel %vm885, %v635, 256
      %v902 = vsel %vm886, %v634, 256
      %v903 = vsel %vm887, %v635, 256
      %v904 = vsel %vm888, %v634, 256
      %v905 = vsel %vm889, %v635, 256
      %v906 = vsel %vm890, %v634, 256
      %v907 = vsel %vm891, %v635, 256
      %v908 = vsel %vm892, %v634, 256
      %v909 = vsel %vm893, %v635, 256
      %v910 = vsel %vm894, %v634, 256
      %v911 = vsel %vm895, %v635, 256
      %v912 = vsel %vm896, %v634, 256
      %v913 = vsel %vm897, %v635, 256
      %v914 = vsel %vm898, %v634, 256
      %v915 = vsel %vm899, %v635, 256
      %vm916 = vcmp.lt.s32.totalorder %v900, %v901
      %v917 = vsel %vm916, %v900, %v901
      %v918 = vand.u32 %v917, 65535
      %v919 = vshra.s32 %v917, 16
      %v920 = vcvt.s32.f32 %v918
      %v921 = vcvt.s32.f32 %v919
      %922 = vmin.xlane.f32.xlu0 %v921
      %v923 = vpop.xlane.xlu0 %922
      %vm924 = vcmp.eq.f32.partialorder %v921, %v923
      %v925 = vsel %vm924, %v920, inf
      %926 = vmin.xlane.f32.xlu0 %v925
      %v927 = vpop.xlane.xlu0 %926
      %v928 = vcvt.f32.s32 %v927
      %v929 = vcvt.f32.s32 %v923
      %v930 = vshll.u32 %v929, 16
      %v931 = vadd.s32 %v930, %v928
      %vm932 = vcmp.lt.s32.totalorder %v902, %v903
      %v933 = vsel %vm932, %v902, %v903
      %v934 = vand.u32 %v933, 65535
      %v935 = vshra.s32 %v933, 16
      %v936 = vcvt.s32.f32 %v934
      %v937 = vcvt.s32.f32 %v935
      %938 = vmin.xlane.f32.xlu0 %v937
      %v939 = vpop.xlane.xlu0 %938
      %vm940 = vcmp.eq.f32.partialorder %v937, %v939
      %v941 = vsel %vm940, %v936, inf
      %942 = vmin.xlane.f32.xlu0 %v941
      %v943 = vpop.xlane.xlu0 %942
      %v944 = vcvt.f32.s32 %v943
      %v945 = vcvt.f32.s32 %v939
      %v946 = vshll.u32 %v945, 16
      %v947 = vadd.s32 %v946, %v944
      %vm948 = vcmp.lt.s32.totalorder %v904, %v905
      %v949 = vsel %vm948, %v904, %v905
      %v950 = vand.u32 %v949, 65535
      %v951 = vshra.s32 %v949, 16
      %v952 = vcvt.s32.f32 %v950
      %v953 = vcvt.s32.f32 %v951
      %954 = vmin.xlane.f32.xlu0 %v953
      %v955 = vpop.xlane.xlu0 %954
      %vm956 = vcmp.eq.f32.partialorder %v953, %v955
      %v957 = vsel %vm956, %v952, inf
      %958 = vmin.xlane.f32.xlu0 %v957
      %v959 = vpop.xlane.xlu0 %958
      %v960 = vcvt.f32.s32 %v959
      %v961 = vcvt.f32.s32 %v955
      %v962 = vshll.u32 %v961, 16
      %v963 = vadd.s32 %v962, %v960
      %vm964 = vcmp.lt.s32.totalorder %v906, %v907
      %v965 = vsel %vm964, %v906, %v907
      %v966 = vand.u32 %v965, 65535
      %v967 = vshra.s32 %v965, 16
      %v968 = vcvt.s32.f32 %v966
      %v969 = vcvt.s32.f32 %v967
      %970 = vmin.xlane.f32.xlu0 %v969
      %v971 = vpop.xlane.xlu0 %970
      %vm972 = vcmp.eq.f32.partialorder %v969, %v971
      %v973 = vsel %vm972, %v968, inf
      %974 = vmin.xlane.f32.xlu0 %v973
      %v975 = vpop.xlane.xlu0 %974
      %v976 = vcvt.f32.s32 %v975
      %v977 = vcvt.f32.s32 %v971
      %v978 = vshll.u32 %v977, 16
      %v979 = vadd.s32 %v978, %v976
      %vm980 = vcmp.lt.s32.totalorder %v908, %v909
      %v981 = vsel %vm980, %v908, %v909
      %v982 = vand.u32 %v981, 65535
      %v983 = vshra.s32 %v981, 16
      %v984 = vcvt.s32.f32 %v982
      %v985 = vcvt.s32.f32 %v983
      %986 = vmin.xlane.f32.xlu0 %v985
      %v987 = vpop.xlane.xlu0 %986
      %vm988 = vcmp.eq.f32.partialorder %v985, %v987
      %v989 = vsel %vm988, %v984, inf
      %990 = vmin.xlane.f32.xlu0 %v989
      %v991 = vpop.xlane.xlu0 %990
      %v992 = vcvt.f32.s32 %v991
      %v993 = vcvt.f32.s32 %v987
      %v994 = vshll.u32 %v993, 16
      %v995 = vadd.s32 %v994, %v992
      %vm996 = vcmp.lt.s32.totalorder %v910, %v911
      %v997 = vsel %vm996, %v910, %v911
      %v998 = vand.u32 %v997, 65535
      %v999 = vshra.s32 %v997, 16
      %v1000 = vcvt.s32.f32 %v998
      %v1001 = vcvt.s32.f32 %v999
      %1002 = vmin.xlane.f32.xlu0 %v1001
      %v1003 = vpop.xlane.xlu0 %1002
      %vm1004 = vcmp.eq.f32.partialorder %v1001, %v1003
      %v1005 = vsel %vm1004, %v1000, inf
      %1006 = vmin.xlane.f32.xlu0 %v1005
      %v1007 = vpop.xlane.xlu0 %1006
      %v1008 = vcvt.f32.s32 %v1007
      %v1009 = vcvt.f32.s32 %v1003
      %v1010 = vshll.u32 %v1009, 16
      %v1011 = vadd.s32 %v1010, %v1008
      %vm1012 = vcmp.lt.s32.totalorder %v912, %v913
      %v1013 = vsel %vm1012, %v912, %v913
      %v1014 = vand.u32 %v1013, 65535
      %v1015 = vshra.s32 %v1013, 16
      %v1016 = vcvt.s32.f32 %v1014
      %v1017 = vcvt.s32.f32 %v1015
      %1018 = vmin.xlane.f32.xlu0 %v1017
      %v1019 = vpop.xlane.xlu0 %1018
      %vm1020 = vcmp.eq.f32.partialorder %v1017, %v1019
      %v1021 = vsel %vm1020, %v1016, inf
      %1022 = vmin.xlane.f32.xlu0 %v1021
      %v1023 = vpop.xlane.xlu0 %1022
      %v1024 = vcvt.f32.s32 %v1023
      %v1025 = vcvt.f32.s32 %v1019
      %v1026 = vshll.u32 %v1025, 16
      %v1027 = vadd.s32 %v1026, %v1024
      %vm1028 = vcmp.lt.s32.totalorder %v914, %v915
      %v1029 = vsel %vm1028, %v914, %v915
      %v1030 = vand.u32 %v1029, 65535
      %v1031 = vshra.s32 %v1029, 16
      %v1032 = vcvt.s32.f32 %v1030
      %v1033 = vcvt.s32.f32 %v1031
      %1034 = vmin.xlane.f32.xlu0 %v1033
      %v1035 = vpop.xlane.xlu0 %1034
      %vm1036 = vcmp.eq.f32.partialorder %v1033, %v1035
      %v1037 = vsel %vm1036, %v1032, inf
      %1038 = vmin.xlane.f32.xlu0 %v1037
      %v1039 = vpop.xlane.xlu0 %1038
      %v1040 = vcvt.f32.s32 %v1039
      %v1041 = vcvt.f32.s32 %v1035
      %v1042 = vshll.u32 %v1041, 16
      %v1043 = vadd.s32 %v1042, %v1040
      %v1044 = vperm.slane %v931, %v634
      %v1045 = vperm.slane %v947, %v634
      %v1046 = vperm.slane %v963, %v634
      %v1047 = vperm.slane %v979, %v634
      %v1048 = vperm.slane %v995, %v634
      %v1049 = vperm.slane %v1011, %v634
      %v1050 = vperm.slane %v1027, %v634
      %v1051 = vperm.slane %v1043, %v634
      %vm1052 = vcmask 1041409
      %v1053 = vsel %vm1052, %v1045, %v1044
      %vm1054 = vcmask 1042434
      %v1055 = vsel %vm1054, %v1046, %v1053
      %vm1056 = vcmask 1043459
      %v1057 = vsel %vm1056, %v1047, %v1055
      %vm1058 = vcmask 1044484
      %v1059 = vsel %vm1058, %v1048, %v1057
      %vm1060 = vcmask 1045509
      %v1061 = vsel %vm1060, %v1049, %v1059
      %vm1062 = vcmask 1046534
      %v1063 = vsel %vm1062, %v1050, %v1061
      %vm1064 = vcmask 1047559
      %v1065 = vsel %vm1064, %v1051, %v1063
      %vm1066 = vcmask 64512
      %1067 = vst.msk [vmem:[%s222] sm:$0xff] %vm1066, %v1065
      %v1076 = vperm.slane %v746, %v634
      %v1077 = vperm.slane %v761, %v634
      %v1078 = vperm.slane %v776, %v634
      %v1079 = vperm.slane %v791, %v634
      %v1080 = vperm.slane %v806, %v634
      %v1081 = vperm.slane %v821, %v634
      %v1082 = vperm.slane %v836, %v634
      %v1083 = vperm.slane %v851, %v634
      %v1084 = vsel %vm1052, %v1077, %v1076
      %v1085 = vsel %vm1054, %v1078, %v1084
      %v1086 = vsel %vm1056, %v1079, %v1085
      %v1087 = vsel %vm1058, %v1080, %v1086
      %v1088 = vsel %vm1060, %v1081, %v1087
      %v1089 = vsel %vm1062, %v1082, %v1088
      %v1090 = vsel %vm1064, %v1083, %v1089
      %1092 = vst.msk [vmem:[%s226] sm:$0xff] %vm1066, %v1090
      %s1093 = smul.u32 8, %s16
      %p1094 = scmp.lt.s32.totalorder %s1093, 15
      %s1095 = scalar_select %p1094, %s1093, 15
      %s1096 = smul.addr %s1095, 2
      %s1097 = smul.addr %s1096, 8
      %s1098 = scalar_lea.vmem %s2, %s1097
      %p1099 = scmp.lt.s32.totalorder %s16, 1
      %s1100 = scalar_select %p1099, %s16, 1
      %s1101 = smul.addr %s1100, 8
      %s1102 = scalar_lea.vmem %s3, %s1101
      %p1103 = scmp.lt.s32.totalorder %s16, 1
      %s1104 = scalar_select %p1103, %s16, 1
      %s1105 = smul.addr %s1104, 8
      %s1106 = scalar_lea.vmem %s4, %s1105
      // Predicated region
      $region29: #{keyp_head_forward.1} parent=27 // pred_check
        %p1107 = pneg %p81
      $region30: #{keyp_head_forward.1} parent=27 // pred_check_branch
        %1109 = sbr.rel (%p1107) target = $region32
      $region31: #{keyp_head_forward.1} parent=27 // pred_region
        %s1110 = smul.u32 8, %s16
      $region32: #{keyp_head_forward.1} parent=27 // pred_fallthru
        _
      // Predicated region
      $region33: #{keyp_head_forward.1} parent=27 // pred_check
        %p1111 = pneg %p107
      $region34: #{keyp_head_forward.1} parent=27 // pred_check_branch
        %1113 = sbr.rel (%p1111) target = $region36
      $region35: #{keyp_head_forward.1} parent=27 // pred_region
        _
      $region36: #{keyp_head_forward.1} parent=27 // pred_fallthru
        _
      // Predicated region
      $region37: #{keyp_head_forward.1} parent=27 // pred_check
        %p1114 = pneg %p133
      $region38: #{keyp_head_forward.1} parent=27 // pred_check_branch
        %1116 = sbr.rel (%p1114) target = $region40
      $region39: #{keyp_head_forward.1} parent=27 // pred_region
        _
      $region40: #{keyp_head_forward.1} parent=27 // pred_fallthru
        _
    $region28: #{keyp_head_forward.1} parent=5 // pred_fallthru
      _
    %p1117 = scmp.le.s32.totalorder 2, %s11
    // Predicated region
    $region41: #{keyp_head_forward.1} parent=5 // pred_check
      %p1118 = pneg %p1117
    $region42: #{keyp_head_forward.1} parent=5 // pred_check_branch
      %1120 = sbr.rel (%p1118) target = $region44
    $region43: #{keyp_head_forward.1} parent=5 // pred_region
      %s1121 = ssub.s32 %s11, 2
      // Predicated region
      $region45: #{keyp_head_forward.1} parent=43 // pred_check
        %p1122 = pneg %p87
      $region46: #{keyp_head_forward.1} parent=43 // pred_check_branch
        %1124 = sbr.rel (%p1122) target = $region48
      $region47: #{keyp_head_forward.1} parent=43 // pred_region
        %s1125 = smul.u32 8, %s17
        %p1126 = scmp.lt.s32.totalorder %s1125, 15
        %s1127 = scalar_select %p1126, %s1125, 15
        %s1128 = smul.addr %s1127, 2
        %s1129 = smul.addr %s1128, 8
        %s1130 = scalar_lea.vmem %s2, %s1129
      $region48: #{keyp_head_forward.1} parent=43 // pred_fallthru
        _
      // Predicated region
      $region49: #{keyp_head_forward.1} parent=43 // pred_check
        %p1131 = pneg %p113
      $region50: #{keyp_head_forward.1} parent=43 // pred_check_branch
        %1133 = sbr.rel (%p1131) target = $region52
      $region51: #{keyp_head_forward.1} parent=43 // pred_region
        %p1134 = scmp.lt.s32.totalorder %s17, 1
        %s1135 = scalar_select %p1134, %s17, 1
        %s1136 = smul.addr %s1135, 8
        %s1137 = scalar_lea.vmem %s3, %s1136
      $region52: #{keyp_head_forward.1} parent=43 // pred_fallthru
        _
      // Predicated region
      $region53: #{keyp_head_forward.1} parent=43 // pred_check
        %p1138 = pneg %p139
      $region54: #{keyp_head_forward.1} parent=43 // pred_check_branch
        %1140 = sbr.rel (%p1138) target = $region56
      $region55: #{keyp_head_forward.1} parent=43 // pred_region
        %p1141 = scmp.lt.s32.totalorder %s17, 1
        %s1142 = scalar_select %p1141, %s17, 1
        %s1143 = smul.addr %s1142, 8
        %s1144 = scalar_lea.vmem %s4, %s1143
      $region56: #{keyp_head_forward.1} parent=43 // pred_fallthru
        _
    $region44: #{keyp_head_forward.1} parent=5 // pred_fallthru
      _
  $region6: #{keyp_head_forward.1} parent=0 // loop_footer
    %s15 = sadd.s32 1, %s11
  $region7: #{keyp_head_forward.1} parent=0 // loop_footer_branch
    %10 = sbr.rel target = $region3
  $region8: #{keyp_head_forward.1} parent=0 // loop_exit
    _

</llo_original>
